<compile_context>
chip_gen: v7x
topology: tpu7x:2x2x1
jax: 0.10.0
libtpu: 0.0.40
codegen_flags: <defaults>
</compile_context>

<pallas_src>
import functools

import jax
import jax.numpy as jnp
from jax.experimental import pallas as pl
from jax.experimental.pallas import tpu as pltpu

_EPS = 1e-07


# ---------------------------------------------------------------------------
# Per-generation tile sizing.
# ---------------------------------------------------------------------------
def _vmem_capacity_bytes():
    try:
        return int(pltpu.get_tpu_info().vmem_capacity_bytes)
    except Exception:
        return 64 * 1024 * 1024  # conservative (v7x-sized) fallback


def _tile_budget_bytes():
    # Total budget for the 4 resident copies of the main tile
    # (2x double-buffered input + 2x double-buffered output), f32.
    return min(_vmem_capacity_bytes() // 4, 32 * 1024 * 1024)


def _vmem_limit_bytes():
    # Explicit scoped-VMEM limit: half the physical capacity, capped at 64 MiB.
    return int(min(_vmem_capacity_bytes() // 2, 64 * 1024 * 1024))


def _largest_divisor_multiple_of(total, base, cap):
    """Largest divisor of `total` that is a multiple of `base` and <= cap (or None)."""
    best = None
    d = base
    cap = min(cap, total)
    while d <= cap:
        if total % d == 0:
            best = d
        d += base
    return best


def _pick_col_tile(total_cols, row_tile, budget_bytes):
    """Column tile: multiple of 128 (or the full width), sized to the VMEM budget."""
    max_cols = max(128, budget_bytes // (16 * row_tile))  # 4 copies * 4 B/elem
    if total_cols <= max_cols or total_cols % 128 != 0:
        return total_cols  # full width is always layout-legal
    best = 128
    t = 128
    while t <= max_cols:
        if total_cols % t == 0:
            best = t
        t += 128
    return best


# ---------------------------------------------------------------------------
# Kernels.
# ---------------------------------------------------------------------------
def _bn_rows_kernel(x_ref, rm_ref, inv_ref, out_ref, *rest, training):
    """4-D path: rows of the (N*C, H*W) slab are reduction groups; reduce over lanes."""
    x = x_ref[...]                                   # (ROW_TILE, COL_TILE) f32
    out_ref[...] = (x - rm_ref[...]) * inv_ref[...]  # (ROW_TILE, 1) broadcasts over lanes

    if training:
        sum_ref, sq_ref, acc_s, acc_q = rest
        j = pl.program_id(1)

        @pl.when(j == 0)
        def _():
            acc_s[...] = jnp.zeros_like(acc_s)
            acc_q[...] = jnp.zeros_like(acc_q)

        acc_s[...] += jnp.sum(x, axis=1, keepdims=True)
        acc_q[...] += jnp.sum(x * x, axis=1, keepdims=True)

        @pl.when(j == pl.num_programs(1) - 1)
        def _():
            sum_ref[...] = acc_s[...]
            sq_ref[...] = acc_q[...]


def _bn_cols_kernel(x_ref, rm_ref, inv_ref, out_ref, *rest, training):
    """2-D path: channels on the lane axis; reduce over rows (sublanes + grid)."""
    x = x_ref[...]                                   # (N_TILE, D) f32
    out_ref[...] = (x - rm_ref[...]) * inv_ref[...]  # (1, D) broadcasts over sublanes

    if training:
        sum_ref, sq_ref, acc_s, acc_q = rest
        i = pl.program_id(0)

        @pl.when(i == 0)
        def _():
            acc_s[...] = jnp.zeros_like(acc_s)
            acc_q[...] = jnp.zeros_like(acc_q)

        acc_s[...] += jnp.sum(x, axis=0, keepdims=True)
        acc_q[...] += jnp.sum(x * x, axis=0, keepdims=True)

        @pl.when(i == pl.num_programs(0) - 1)
        def _():
            sum_ref[...] = acc_s[...]
            sq_ref[...] = acc_q[...]


# ---------------------------------------------------------------------------
# Wrappers.
# ---------------------------------------------------------------------------
def _bn_4d(x, running_mean, running_var, momentum, training):
    n, c, h, w = x.shape
    rows, cols = n * c, h * w

    x2 = x.reshape(rows, cols).astype(jnp.float32)   # zero-copy view of contiguous NCHW

    rm = running_mean.astype(jnp.float32)
    inv = 1.0 / (running_var.astype(jnp.float32) + _EPS)   # divide hoisted: once per channel
    rm_rows = jnp.tile(rm, n).reshape(rows, 1)              # row -> channel broadcast columns
    inv_rows = jnp.tile(inv, n).reshape(rows, 1)

    budget = _tile_budget_bytes()
    # Row tile must be a multiple of 8 (f32 sublanes) or the full row extent.
    # TODO(synk): for very large N*C with C not divisible by 8, pad channels instead.
    row_tile = _largest_divisor_multiple_of(rows, 8, 512) or rows
    col_tile = _pick_col_tile(cols, row_tile, budget)
    grid = (rows // row_tile, cols // col_tile)

    in_specs = [
        pl.BlockSpec((row_tile, col_tile), lambda r, j: (r, j)),
        pl.BlockSpec((row_tile, 1), lambda r, j: (r, 0)),
        pl.BlockSpec((row_tile, 1), lambda r, j: (r, 0)),
    ]
    out_shape = [jax.ShapeDtypeStruct((rows, cols), jnp.float32)]
    out_specs = [pl.BlockSpec((row_tile, col_tile), lambda r, j: (r, j))]
    scratch_shapes = []
    if training:
        out_shape += [
            jax.ShapeDtypeStruct((rows, 1), jnp.float32),
            jax.ShapeDtypeStruct((rows, 1), jnp.float32),
        ]
        out_specs += [
            pl.BlockSpec((row_tile, 1), lambda r, j: (r, 0)),
            pl.BlockSpec((row_tile, 1), lambda r, j: (r, 0)),
        ]
        scratch_shapes = [
            pltpu.VMEM((row_tile, 1), jnp.float32),
            pltpu.VMEM((row_tile, 1), jnp.float32),
        ]

    outs = pl.pallas_call(
        functools.partial(_bn_rows_kernel, training=training),
        out_shape=tuple(out_shape),
        grid=grid,
        in_specs=in_specs,
        out_specs=tuple(out_specs),
        scratch_shapes=scratch_shapes,
        compiler_params=pltpu.CompilerParams(
            # Row blocks are independent -> megacore can split them on v7x; the column-tile
            # axis carries the stat accumulator, so it is "arbitrary" in training and fully
            # parallel in eval.
            dimension_semantics=("parallel", "arbitrary" if training else "parallel"),
            vmem_limit_bytes=_vmem_limit_bytes(),
        ),
    )(x2, rm_rows, inv_rows)

    out = outs[0].reshape(n, c, h, w).astype(x.dtype)
    if not training:
        return out, running_mean, running_var

    row_sum, row_sq = outs[1], outs[2]
    count = float(n * h * w)
    ch_sum = row_sum.reshape(n, c).sum(axis=0)
    ch_sq = row_sq.reshape(n, c).sum(axis=0)
    mean = ch_sum / count
    # Single-pass variance (f32 accumulators); clamp guards tiny negative rounding.
    var = jnp.maximum(ch_sq / count - mean * mean, 0.0)
    std = jnp.sqrt(var)
    new_rm = momentum * running_mean + (1.0 - momentum) * mean.astype(running_mean.dtype)
    new_rv = momentum * running_var + (1.0 - momentum) * std.astype(running_var.dtype)
    return out, new_rm, new_rv


def _bn_2d(x, running_mean, running_var, momentum, training):
    nrows, d = x.shape
    x2 = x.astype(jnp.float32)

    rm = running_mean.astype(jnp.float32).reshape(1, d)
    inv = (1.0 / (running_var.astype(jnp.float32) + _EPS)).reshape(1, d)

    budget = _tile_budget_bytes()
    max_rows = max(8, budget // (16 * d))
    row_tile = _largest_divisor_multiple_of(nrows, 8, min(512, max_rows)) or nrows
    grid = (nrows // row_tile,)

    in_specs = [
        pl.BlockSpec((row_tile, d), lambda i: (i, 0)),
        pl.BlockSpec((1, d), lambda i: (0, 0)),
        pl.BlockSpec((1, d), lambda i: (0, 0)),
    ]
    out_shape = [jax.ShapeDtypeStruct((nrows, d), jnp.float32)]
    out_specs = [pl.BlockSpec((row_tile, d), lambda i: (i, 0))]
    scratch_shapes = []
    if training:
        out_shape += [
            jax.ShapeDtypeStruct((1, d), jnp.float32),
            jax.ShapeDtypeStruct((1, d), jnp.float32),
        ]
        out_specs += [
            pl.BlockSpec((1, d), lambda i: (0, 0)),
            pl.BlockSpec((1, d), lambda i: (0, 0)),
        ]
        scratch_shapes = [
            pltpu.VMEM((1, d), jnp.float32),
            pltpu.VMEM((1, d), jnp.float32),
        ]

    outs = pl.pallas_call(
        functools.partial(_bn_cols_kernel, training=training),
        out_shape=tuple(out_shape),
        grid=grid,
        in_specs=in_specs,
        out_specs=tuple(out_specs),
        scratch_shapes=scratch_shapes,
        compiler_params=pltpu.CompilerParams(
            dimension_semantics=("arbitrary",) if training else ("parallel",),
            vmem_limit_bytes=_vmem_limit_bytes(),
        ),
    )(x2, rm, inv)

    out = outs[0].astype(x.dtype)
    if not training:
        return out, running_mean, running_var

    col_sum, col_sq = outs[1][0], outs[2][0]
    count = float(nrows)
    mean = col_sum / count
    var = jnp.maximum(col_sq / count - mean * mean, 0.0)
    std = jnp.sqrt(var)
    new_rm = momentum * running_mean + (1.0 - momentum) * mean.astype(running_mean.dtype)
    new_rv = momentum * running_var + (1.0 - momentum) * std.astype(running_var.dtype)
    return out, new_rm, new_rv


def our_batch_norm(x, running_mean, running_var, momentum=0.9, training=True):
    """Returns (out, new_running_mean, new_running_var) matching OurBatchNorm.forward."""
    if x.ndim == 2:
        return _bn_2d(x, running_mean, running_var, momentum, training)
    if x.ndim == 4:
        return _bn_4d(x, running_mean, running_var, momentum, training)
    raise ValueError("OurBatchNorm supports 2-D or 4-D inputs")


# ---------------------------------------------------------------------------
# Pure-JAX replica of the PyTorch forward (training mode) for verification.
# ---------------------------------------------------------------------------
def _reference(x, running_mean, running_var, momentum=0.9):
    if x.ndim == 2:
        out = (x - running_mean[None, :]) / (running_var[None, :] + _EPS)
        mean = x.mean(0)
        std = jnp.sqrt(((x - mean[None, :]) ** 2).mean(0))
    else:
        out = (x - running_mean[None, :, None, None]) / (
            running_var[None, :, None, None] + _EPS)
        mean = x.mean(axis=(0, 2, 3))
        std = jnp.sqrt(((x - mean[None, :, None, None]) ** 2).mean(axis=(0, 2, 3)))
    new_rm = momentum * running_mean + (1.0 - momentum) * mean
    new_rv = momentum * running_var + (1.0 - momentum) * std
    return out, new_rm, new_rv


if __name__ == "__main__":
    key = jax.random.PRNGKey(0)
    k4, k2 = jax.random.split(key)

    # --- 4-D NCHW case ---
    N, C, H, W = 2, 4, 16, 16
    x4 = jax.random.normal(k4, (N, C, H, W), dtype=jnp.float32) * 2.0 + 0.5
    rm4 = jnp.zeros((C,), dtype=jnp.float32)
    rv4 = jnp.ones((C,), dtype=jnp.float32)

    bn4_train = jax.jit(functools.partial(our_batch_norm, momentum=0.9, training=True))
    out4, nrm4, nrv4 = bn4_train(x4, rm4, rv4)
    jax.block_until_ready((out4, nrm4, nrv4))

    ref_out4, ref_rm4, ref_rv4 = _reference(x4, rm4, rv4, momentum=0.9)
    assert jnp.allclose(out4, ref_out4, atol=1e-5, rtol=1e-5)
    assert jnp.allclose(nrm4, ref_rm4, atol=1e-5, rtol=1e-5)
    assert jnp.allclose(nrv4, ref_rv4, atol=1e-5, rtol=1e-5)

    # Eval mode: normalization only, buffers untouched.
    bn4_eval = jax.jit(functools.partial(our_batch_norm, momentum=0.9, training=False))
    out4e, erm4, erv4 = bn4_eval(x4, rm4, rv4)
    jax.block_until_ready(out4e)
    assert jnp.allclose(out4e, ref_out4, atol=1e-5, rtol=1e-5)
    assert jnp.allclose(erm4, rm4) and jnp.allclose(erv4, rv4)

    # --- 2-D (N, D) case ---
    N2, D2 = 16, 32
    x2 = jax.random.normal(k2, (N2, D2), dtype=jnp.float32) * 1.5 - 0.25
    rm2 = jnp.zeros((D2,), dtype=jnp.float32)
    rv2 = jnp.ones((D2,), dtype=jnp.float32)

    bn2_train = jax.jit(functools.partial(our_batch_norm, momentum=0.9, training=True))
    out2, nrm2, nrv2 = bn2_train(x2, rm2, rv2)
    jax.block_until_ready((out2, nrm2, nrv2))

    ref_out2, ref_rm2, ref_rv2 = _reference(x2, rm2, rv2, momentum=0.9)
    assert jnp.allclose(out2, ref_out2, atol=1e-5, rtol=1e-5)
    assert jnp.allclose(nrm2, ref_rm2, atol=1e-5, rtol=1e-5)
    assert jnp.allclose(nrv2, ref_rv2, atol=1e-5, rtol=1e-5)

    print("KERNEL_OK")
</pallas_src>

<mosaic_0001>
module attributes {stable_mosaic.version = 11 : i64} {
  func.func @_bn_rows_kernel(%arg0: i32, %arg1: i32, %arg2: memref<8x256xf32, #tpu.memory_space<vmem>>, %arg3: memref<8x1xf32, #tpu.memory_space<vmem>>, %arg4: memref<8x1xf32, #tpu.memory_space<vmem>>, %arg5: memref<8x256xf32, #tpu.memory_space<vmem>>, %arg6: memref<8x1xf32, #tpu.memory_space<vmem>>, %arg7: memref<8x1xf32, #tpu.memory_space<vmem>>, %arg8: memref<8x1xf32, #tpu.memory_space<vmem>>, %arg9: memref<8x1xf32, #tpu.memory_space<vmem>>) attributes {dimension_semantics = [#tpu.dimension_semantics<parallel>, #tpu.dimension_semantics<arbitrary>], iteration_bounds = array<i64: 1, 1>, scalar_prefetch = 0 : i64, scratch_operands = 2 : i64, tpu.core_type = #tpu.core_type<tc>, window_params = [{transform_indices = @transform_0, window_bounds = array<i64: 8, 256>}, {transform_indices = @transform_1, window_bounds = array<i64: 8, 1>}, {transform_indices = @transform_2, window_bounds = array<i64: 8, 1>}, {transform_indices = @transform_3, window_bounds = array<i64: 8, 256>}, {transform_indices = @transform_4, window_bounds = array<i64: 8, 1>}, {transform_indices = @transform_5, window_bounds = array<i64: 8, 1>}]} {
    %c0 = arith.constant 0 : index
    %c0_0 = arith.constant 0 : index
    %0 = vector.load %arg2[%c0, %c0_0] : memref<8x256xf32, #tpu.memory_space<vmem>>, vector<8x256xf32>
    %c0_1 = arith.constant 0 : index
    %c0_2 = arith.constant 0 : index
    %1 = vector.load %arg3[%c0_1, %c0_2] : memref<8x1xf32, #tpu.memory_space<vmem>>, vector<8x1xf32>
    %2 = vector.broadcast %1 : vector<8x1xf32> to vector<8x256xf32>
    %3 = arith.subf %0, %2 : vector<8x256xf32>
    %c0_3 = arith.constant 0 : index
    %c0_4 = arith.constant 0 : index
    %4 = vector.load %arg4[%c0_3, %c0_4] : memref<8x1xf32, #tpu.memory_space<vmem>>, vector<8x1xf32>
    %5 = vector.broadcast %4 : vector<8x1xf32> to vector<8x256xf32>
    %6 = arith.mulf %3, %5 : vector<8x256xf32>
    %c0_5 = arith.constant 0 : index
    %c0_6 = arith.constant 0 : index
    %7 = vector.load %arg5[%c0_5, %c0_6] : memref<8x256xf32, #tpu.memory_space<vmem>>, vector<8x256xf32>
    tpu.vector_store %arg5[%c0_5, %c0_6], %6 {strides = array<i32>} : memref<8x256xf32, #tpu.memory_space<vmem>>, vector<8x256xf32>,
    %c0_i32 = arith.constant 0 : i32
    %8 = arith.cmpi eq, %arg1, %c0_i32 : i32
    %9 = arith.extui %8 : i1 to i32
    %c0_i32_7 = arith.constant 0 : i32
    %10 = arith.cmpi ne, %9, %c0_i32_7 : i32
    scf.if %10 {
      %cst_19 = arith.constant 0.000000e+00 : f32
      %25 = vector.broadcast %cst_19 : f32 to vector<8x1xf32>
      %c0_20 = arith.constant 0 : index
      %c0_21 = arith.constant 0 : index
      %26 = vector.load %arg8[%c0_20, %c0_21] : memref<8x1xf32, #tpu.memory_space<vmem>>, vector<8x1xf32>
      tpu.vector_store %arg8[%c0_20, %c0_21], %25 {strides = array<i32>} : memref<8x1xf32, #tpu.memory_space<vmem>>, vector<8x1xf32>,
      %cst_22 = arith.constant 0.000000e+00 : f32
      %27 = vector.broadcast %cst_22 : f32 to vector<8x1xf32>
      %c0_23 = arith.constant 0 : index
      %c0_24 = arith.constant 0 : index
      %28 = vector.load %arg9[%c0_23, %c0_24] : memref<8x1xf32, #tpu.memory_space<vmem>>, vector<8x1xf32>
      tpu.vector_store %arg9[%c0_23, %c0_24], %27 {strides = array<i32>} : memref<8x1xf32, #tpu.memory_space<vmem>>, vector<8x1xf32>,
    } else {
    }
    %c0_8 = arith.constant 0 : index
    %c0_9 = arith.constant 0 : index
    %11 = vector.load %arg8[%c0_8, %c0_9] : memref<8x1xf32, #tpu.memory_space<vmem>>, vector<8x1xf32>
    %cst = arith.constant dense<0.000000e+00> : vector<8xf32>
    %12 = vector.multi_reduction <add>, %0, %cst [1] : vector<8x256xf32> to vector<8xf32>
    %13 = vector.shape_cast %12 : vector<8xf32> to vector<8x1xf32>
    %14 = arith.addf %11, %13 : vector<8x1xf32>
    %c0_10 = arith.constant 0 : index
    %c0_11 = arith.constant 0 : index
    %15 = vector.load %arg8[%c0_10, %c0_11] : memref<8x1xf32, #tpu.memory_space<vmem>>, vector<8x1xf32>
    tpu.vector_store %arg8[%c0_10, %c0_11], %14 {strides = array<i32>} : memref<8x1xf32, #tpu.memory_space<vmem>>, vector<8x1xf32>,
    %c0_12 = arith.constant 0 : index
    %c0_13 = arith.constant 0 : index
    %16 = vector.load %arg9[%c0_12, %c0_13] : memref<8x1xf32, #tpu.memory_space<vmem>>, vector<8x1xf32>
    %17 = arith.mulf %0, %0 : vector<8x256xf32>
    %cst_14 = arith.constant dense<0.000000e+00> : vector<8xf32>
    %18 = vector.multi_reduction <add>, %17, %cst_14 [1] : vector<8x256xf32> to vector<8xf32>
    %19 = vector.shape_cast %18 : vector<8xf32> to vector<8x1xf32>
    %20 = arith.addf %16, %19 : vector<8x1xf32>
    %c0_15 = arith.constant 0 : index
    %c0_16 = arith.constant 0 : index
    %21 = vector.load %arg9[%c0_15, %c0_16] : memref<8x1xf32, #tpu.memory_space<vmem>>, vector<8x1xf32>
    tpu.vector_store %arg9[%c0_15, %c0_16], %20 {strides = array<i32>} : memref<8x1xf32, #tpu.memory_space<vmem>>, vector<8x1xf32>,
    %c0_i32_17 = arith.constant 0 : i32
    %22 = arith.cmpi eq, %arg1, %c0_i32_17 : i32
    %23 = arith.extui %22 : i1 to i32
    %c0_i32_18 = arith.constant 0 : i32
    %24 = arith.cmpi ne, %23, %c0_i32_18 : i32
    scf.if %24 {
      %c0_19 = arith.constant 0 : index
      %c0_20 = arith.constant 0 : index
      %25 = vector.load %arg8[%c0_19, %c0_20] : memref<8x1xf32, #tpu.memory_space<vmem>>, vector<8x1xf32>
      %c0_21 = arith.constant 0 : index
      %c0_22 = arith.constant 0 : index
      %26 = vector.load %arg6[%c0_21, %c0_22] : memref<8x1xf32, #tpu.memory_space<vmem>>, vector<8x1xf32>
      tpu.vector_store %arg6[%c0_21, %c0_22], %25 {strides = array<i32>} : memref<8x1xf32, #tpu.memory_space<vmem>>, vector<8x1xf32>,
      %c0_23 = arith.constant 0 : index
      %c0_24 = arith.constant 0 : index
      %27 = vector.load %arg9[%c0_23, %c0_24] : memref<8x1xf32, #tpu.memory_space<vmem>>, vector<8x1xf32>
      %c0_25 = arith.constant 0 : index
      %c0_26 = arith.constant 0 : index
      %28 = vector.load %arg7[%c0_25, %c0_26] : memref<8x1xf32, #tpu.memory_space<vmem>>, vector<8x1xf32>
      tpu.vector_store %arg7[%c0_25, %c0_26], %27 {strides = array<i32>} : memref<8x1xf32, #tpu.memory_space<vmem>>, vector<8x1xf32>,
    } else {
    }
    return
  }
  func.func @transform_0(%arg0: i32, %arg1: i32) -> (i32, i32) {
    %c0_i32 = arith.constant 0 : i32
    return %arg0, %arg1 : i32, i32
  }
  func.func @transform_1(%arg0: i32, %arg1: i32) -> (i32, i32) {
    %c0_i32 = arith.constant 0 : i32
    %c0_i32_0 = arith.constant 0 : i32
    return %arg0, %c0_i32 : i32, i32
  }
  func.func @transform_2(%arg0: i32, %arg1: i32) -> (i32, i32) {
    %c0_i32 = arith.constant 0 : i32
    %c0_i32_0 = arith.constant 0 : i32
    return %arg0, %c0_i32 : i32, i32
  }
  func.func @transform_3(%arg0: i32, %arg1: i32) -> (i32, i32) {
    %c0_i32 = arith.constant 0 : i32
    return %arg0, %arg1 : i32, i32
  }
  func.func @transform_4(%arg0: i32, %arg1: i32) -> (i32, i32) {
    %c0_i32 = arith.constant 0 : i32
    %c0_i32_0 = arith.constant 0 : i32
    return %arg0, %c0_i32 : i32, i32
  }
  func.func @transform_5(%arg0: i32, %arg1: i32) -> (i32, i32) {
    %c0_i32 = arith.constant 0 : i32
    %c0_i32_0 = arith.constant 0 : i32
    return %arg0, %c0_i32 : i32, i32
  }
}

</mosaic_0001>

<llo_original>
// kernel: tile.18
$region0: #{tile.18}
  #allocation0 [shape = 's32[1]{0}', space=sflag, size = 0x4, scoped, tag = 'scoped memory for tile.18']
  %s0 = inlined_call_operand.vmem [shape: f32[4], index: 0, kind: input, shape index: {}]
  %s1 = inlined_call_operand.vmem [shape: f32[2,4], index: 1, kind: output, shape index: {}]
  // Predicated region
  $region2: #{tile.18} parent=0 // pred_check
    _
  $region3: #{tile.18} parent=0 // pred_check_branch
    %3 = sbr.rel (0) target = $region5
  $region4: #{tile.18} parent=0 // pred_region
    _
  $region5: #{tile.18} parent=0 // pred_fallthru
    _
  %v4 = vld [vmem:[%s0] ss:$0 sm:$0xff]
  %5 = vst [vmem:[%s1] sm:$0x3] %v4

// kernel: tile.0
$region0: #{tile.0}
  %s0 = inlined_call_operand.vmem [shape: f32[2,4], index: 0, kind: input, shape index: {}]
  %s1 = inlined_call_operand.vmem [shape: f32[8,1], index: 1, kind: output, shape index: {}]
  $region1: #{tile.0} parent=0
    #allocation0 [shape = 'u8[4096]{0}', space=vmem, size = 0x1000, scoped, tag = 'scoped mem for input reshape']
    %s3 = sshllo.u32 0, 2
    %v4 = vld [vmem:[%s0] sm:%s3]
    %5 = vst [vmem:[#allocation0] sm:%s3] %v4
    %v6 = vld [vmem:[#allocation0] sm:$0x3]
    %vm7 = vcmask 7168
    %8 = vst.msk [vmem:[%s1] ss:$4 sm:$0x3] %vm7, %v6
    %v9 = vld [vmem:[#allocation0] sm:$0x3]
    %10 = vrot.lane.b32.xlu0 %v9, 127
    %v11 = vpop.permute.xlu0 %10
    %vm12 = vcmask 7168
    %s13 = scalar_lea.vmem %s1, 1
    %14 = vst.msk [vmem:[%s13] ss:$4 sm:$0x3] %vm12, %v11
    %v15 = vld [vmem:[#allocation0] sm:$0x3]
    %16 = vrot.lane.b32.xlu0 %v15, 126
    %v17 = vpop.permute.xlu0 %16
    %vm18 = vcmask 7168
    %s19 = scalar_lea.vmem %s1, 2
    %20 = vst.msk [vmem:[%s19] ss:$4 sm:$0x3] %vm18, %v17
    %v21 = vld [vmem:[#allocation0] sm:$0x3]
    %22 = vrot.lane.b32.xlu0 %v21, 125
    %v23 = vpop.permute.xlu0 %22
    %vm24 = vcmask 7168
    %s25 = scalar_lea.vmem %s1, 3
    %26 = vst.msk [vmem:[%s25] ss:$4 sm:$0x3] %vm24, %v23

// kernel: our_batch_norm.1
$region0: #{our_batch_norm.1}
  #allocation0 [shape = 'u32[]', space=smem, size = 0x4, offset = 0x4, fixed_abs, tag = 'smem constant byte address 0x4 - core index']
  #allocation1 [shape = 'u32[144,128]{1,0:T(1,128)}', space=vmem, size = 0x12000, scoped, tag = 'internal scratch']
  #allocation2 [shape = 'f32[8,1]{1,0:T(8,128)}', space=vmem, size = 0x1000, scoped, tag = 'scratch operand']
  #allocation3 [shape = 'f32[8,1]{1,0:T(8,128)}', space=vmem, size = 0x1000, scoped, tag = 'scratch operand']
  %s0 = inlined_call_operand.vmem [shape: f32[8,256], index: 0, kind: input, shape index: {}]
  %s1 = inlined_call_operand.vmem [shape: f32[8,1], index: 1, kind: input, shape index: {}]
  %s2 = inlined_call_operand.vmem [shape: f32[8,1], index: 2, kind: input, shape index: {}]
  %s3 = inlined_call_operand.vmem [shape: f32[8,256], index: 3, kind: output, shape index: {0}]
  %s4 = inlined_call_operand.vmem [shape: f32[8,1], index: 4, kind: output, shape index: {1}]
  %s5 = inlined_call_operand.vmem [shape: f32[8,1], index: 5, kind: output, shape index: {2}]
  %6 = xla_tuple %s3, %s4, %s5
  %s7 = sld [smem:[#allocation0]]
  $region46: #{our_batch_norm.1} parent=0
    _
  %s9 = ssub.s32 1, %s7
  %s10 = scalar_select 0, %s9, %s7
  // Predicated region
  $region2: #{our_batch_norm.1} parent=0 // pred_check
    _
  $region3: #{our_batch_norm.1} parent=0 // pred_check_branch
    %12 = sbr.rel (0) target = $region5
  $region4: #{our_batch_norm.1} parent=0 // pred_region
    _
  $region5: #{our_batch_norm.1} parent=0 // pred_fallthru
    _
  // Predicated region
  $region6: #{our_batch_norm.1} parent=0 // pred_check
    _
  $region7: #{our_batch_norm.1} parent=0 // pred_check_branch
    %14 = sbr.rel (0) target = $region9
  $region8: #{our_batch_norm.1} parent=0 // pred_region
    _
  $region9: #{our_batch_norm.1} parent=0 // pred_fallthru
    _
  // Predicated region
  $region10: #{our_batch_norm.1} parent=0 // pred_check
    _
  $region11: #{our_batch_norm.1} parent=0 // pred_check_branch
    %16 = sbr.rel (0) target = $region13
  $region12: #{our_batch_norm.1} parent=0 // pred_region
    _
  $region13: #{our_batch_norm.1} parent=0 // pred_fallthru
    _
  %v17 = vld [vmem:[%s0] sm:$0xff]
  %v18 = vld [vmem:[%s0 + $0x8] sm:$0xff]
  %v19 = vld [vmem:[%s1] sm:$0xff]
  %21 = vset.pattern.permute.xlu0 0
  %22 = vperm.xlu0 %21, %v19
  %v23 = vpop.permute.xlu0 %22
  %v25 = vsub.f32 %v17, %v23
  %v26 = vsub.f32 %v18, %v23
  %v27 = vld [vmem:[%s2] sm:$0xff]
  %29 = vset.pattern.permute.xlu0 0
  %30 = vperm.xlu0 %29, %v27
  %v31 = vpop.permute.xlu0 %30
  %v33 = vmul.f32 %v25, %v31
  %v34 = vmul.f32 %v26, %v31
  %35 = vst [vmem:[%s3] sm:$0xff] %v33
  %36 = vst [vmem:[%s3 + $0x8] sm:$0xff] %v34
  %p37 = scmp.eq.s32.totalorder 0, 0
  // Predicated region
  $region14: #{our_batch_norm.1} parent=0 // pred_check
    %p38 = pneg %p37
  $region15: #{our_batch_norm.1} parent=0 // pred_check_branch
    %40 = sbr.rel (%p38) target = $region17
  $region16: #{our_batch_norm.1} parent=0 // pred_region
    %vm41 = vcmask 7168
    %42 = vst.msk [vmem:[#allocation2] sm:$0xff] %vm41, 0.0
    %43 = vst.msk [vmem:[#allocation3] sm:$0xff] %vm41, 0.0
  $region17: #{our_batch_norm.1} parent=0 // pred_fallthru
    _
  %v44 = vld [vmem:[#allocation2] sm:$0xff]
  %v45 = vadd.f32 %v17, %v18
  %46 = vadd.xlane.f32.xlu0 %v45
  %v47 = vpop.xlane.xlu0 %46
  %v48 = vadd.f32 %v44, %v47
  %vm49 = vcmask 7168
  %50 = vst.msk [vmem:[#allocation2] sm:$0xff] %vm49, %v48
  %v51 = vld [vmem:[#allocation3] sm:$0xff]
  %v52 = vmul.f32 %v17, %v17
  %v53 = vmul.f32 %v18, %v18
  %v54 = vadd.f32 %v52, %v53
  %55 = vadd.xlane.f32.xlu0 %v54
  %v56 = vpop.xlane.xlu0 %55
  %v57 = vadd.f32 %v51, %v56
  %58 = vst.msk [vmem:[#allocation3] sm:$0xff] %vm49, %v57
  // Predicated region
  $region18: #{our_batch_norm.1} parent=0 // pred_check
    %p59 = pneg %p37
  $region19: #{our_batch_norm.1} parent=0 // pred_check_branch
    %61 = sbr.rel (%p59) target = $region21
  $region20: #{our_batch_norm.1} parent=0 // pred_region
    %v62 = vld [vmem:[#allocation2] sm:$0xff]
    %63 = vst.msk [vmem:[%s4] sm:$0xff] %vm49, %v62
    %v64 = vld [vmem:[#allocation3] sm:$0xff]
    %65 = vst.msk [vmem:[%s5] sm:$0xff] %vm49, %v64
  $region21: #{our_batch_norm.1} parent=0 // pred_fallthru
    _
  // Predicated region
  $region22: #{our_batch_norm.1} parent=0 // pred_check
    _
  $region23: #{our_batch_norm.1} parent=0 // pred_check_branch
    %67 = sbr.rel (0) target = $region25
  $region24: #{our_batch_norm.1} parent=0 // pred_region
    _
  $region25: #{our_batch_norm.1} parent=0 // pred_fallthru
    _
  // Predicated region
  $region26: #{our_batch_norm.1} parent=0 // pred_check
    _
  $region27: #{our_batch_norm.1} parent=0 // pred_check_branch
    %69 = sbr.rel (0) target = $region29
  $region28: #{our_batch_norm.1} parent=0 // pred_region
    _
  $region29: #{our_batch_norm.1} parent=0 // pred_fallthru
    _
  // Predicated region
  $region30: #{our_batch_norm.1} parent=0 // pred_check
    _
  $region31: #{our_batch_norm.1} parent=0 // pred_check_branch
    %71 = sbr.rel (0) target = $region33
  $region32: #{our_batch_norm.1} parent=0 // pred_region
    _
  $region33: #{our_batch_norm.1} parent=0 // pred_fallthru
    _
  // Predicated region
  $region34: #{our_batch_norm.1} parent=0 // pred_check
    _
  $region35: #{our_batch_norm.1} parent=0 // pred_check_branch
    %73 = sbr.rel (0) target = $region37
  $region36: #{our_batch_norm.1} parent=0 // pred_region
    _
  $region37: #{our_batch_norm.1} parent=0 // pred_fallthru
    _
  // Predicated region
  $region38: #{our_batch_norm.1} parent=0 // pred_check
    _
  $region39: #{our_batch_norm.1} parent=0 // pred_check_branch
    %75 = sbr.rel (0) target = $region41
  $region40: #{our_batch_norm.1} parent=0 // pred_region
    _
  $region41: #{our_batch_norm.1} parent=0 // pred_fallthru
    _
  // Predicated region
  $region42: #{our_batch_norm.1} parent=0 // pred_check
    _
  $region43: #{our_batch_norm.1} parent=0 // pred_check_branch
    %77 = sbr.rel (0) target = $region45
  $region44: #{our_batch_norm.1} parent=0 // pred_region
    _
  $region45: #{our_batch_norm.1} parent=0 // pred_fallthru
    _

</llo_original>
